<compile_context>
chip_gen: v7x
topology: tpu7x:2x2x1
jax: 0.10.0
libtpu: 0.0.40
codegen_flags: <defaults>
</compile_context>

<pallas_src>
import functools

import jax
import jax.numpy as jnp
from jax import lax
from jax.experimental import pallas as pl
from jax.experimental.pallas import tpu as pltpu

EPS = 1e-6       # LaplaceNLLLoss eps
LANE = 128       # TPU lane width


def _round_up(x, m):
    return ((x + m - 1) // m) * m


# ----------------------------------------------------------------------------
# Per-tile kernel (one grid step = TILE_N agents on the lane axis).
#
# Inputs (lane-dense planes, agent axis padded to n_pad = num_tiles*TILE_N):
#   mu_x, mu_y, sg_x, sg_y : (K, T, TILE_N)
#   y_x, y_y               : (T, TILE_N)
#   pi_t                   : (K, TILE_N)   out_pi transposed (softmax over K)
# Outputs:
#   part (8, 128) f32      : rows 0/1/2, col 0 = [reg_sum, ce_sum, var_sum]
#   best_ade, best_fde     : (1, TILE_N) int32 best-mode indices
# ----------------------------------------------------------------------------
def _msatra_tile_kernel(mux_ref, muy_ref, sgx_ref, sgy_ref,
                        yx_ref, yy_ref, pi_ref,
                        part_ref, bade_ref, bfde_ref,
                        *, n_valid, pred_length):
    f32 = jnp.float32
    mu_x = mux_ref[...].astype(f32)                               # (K, T, TN)
    mu_y = muy_ref[...].astype(f32)
    sg_x = sgx_ref[...].astype(f32)
    sg_y = sgy_ref[...].astype(f32)
    y_x = yx_ref[...].astype(f32)                                 # (T, TN)
    y_y = yy_ref[...].astype(f32)
    pi_t = pi_ref[...].astype(f32)                                # (K, TN)

    K, T, TN = mu_x.shape

    gidx = (pl.program_id(0) * TN
            + lax.broadcasted_iota(jnp.int32, (1, TN), 1))
    valid = gidx < n_valid                                        # (1, TN)

    # ---- per-step Euclidean distances (reused for ADE, FDE, soft targets) ---
    dx = mu_x - y_x[None, :, :]
    dy = mu_y - y_y[None, :, :]
    dist = jnp.sqrt(dx * dx + dy * dy)                            # (K, T, TN)
    l2_norm = jnp.sum(dist, axis=1)                               # (K, TN)

    # ---- first-occurrence argmin over modes (torch.argmin semantics) --------
    kidx = lax.broadcasted_iota(jnp.int32, (K, TN), 0)
    minv = jnp.min(l2_norm, axis=0, keepdims=True)
    best_ade = jnp.min(jnp.where(l2_norm == minv, kidx, K),
                       axis=0, keepdims=True)                     # (1, TN) i32
    onehot = (kidx == best_ade).astype(f32)                       # (K, TN)
    sel = onehot[:, None, :]                                      # (K, 1, TN)

    # ---- LaplaceNLLLoss on the best mode (one-hot contraction gather) -------
    adx = jnp.abs(jnp.sum(dx * sel, axis=0))                      # (T, TN)
    ady = jnp.abs(jnp.sum(dy * sel, axis=0))
    sc_x = jnp.maximum(jnp.sum(sg_x * sel, axis=0), EPS)
    sc_y = jnp.maximum(jnp.sum(sg_y * sel, axis=0), EPS)
    nll = jnp.log(4.0 * sc_x * sc_y) + adx / sc_x + ady / sc_y    # (T, TN)
    reg_sum = jnp.sum(jnp.where(valid, nll, 0.0))

    # ---- SoftTargetCrossEntropyLoss on out_pi --------------------------------
    s = l2_norm * (-1.0 / pred_length)
    s = s - jnp.max(s, axis=0, keepdims=True)
    es = jnp.exp(s)
    soft_t = es / jnp.sum(es, axis=0, keepdims=True)              # (K, TN)
    z = pi_t - jnp.max(pi_t, axis=0, keepdims=True)
    logp = z - jnp.log(jnp.sum(jnp.exp(z), axis=0, keepdims=True))
    ce = jnp.sum(-soft_t * logp, axis=0, keepdims=True)           # (1, TN)
    ce_sum = jnp.sum(jnp.where(valid, ce, 0.0))

    # ---- diversity (variety) loss: only i<j pairs, statically unrolled ------
    min_d = None
    for i in range(K):
        for j in range(i + 1, K):
            ddx = mu_x[i] - mu_x[j]
            ddy = mu_y[i] - mu_y[j]
            d = jnp.sum(jnp.sqrt(ddx * ddx + ddy * ddy),
                        axis=0, keepdims=True)                    # (1, TN)
            min_d = d if min_d is None else jnp.minimum(min_d, d)
    if min_d is None:
        # K == 1 -> -inf variety loss, matching the PyTorch reference.
        min_d = jnp.full((1, TN), jnp.inf, dtype=f32)
    var_sum = jnp.sum(jnp.where(valid, min_d, 0.0))

    # ---- FDE best mode (reuses per-step distances) ---------------------------
    l2f = dist[:, T - 1, :]                                       # (K, TN)
    minf = jnp.min(l2f, axis=0, keepdims=True)
    best_fde = jnp.min(jnp.where(l2f == minf, kidx, K),
                       axis=0, keepdims=True)                     # (1, TN) i32

    # ---- per-tile partial sums: one lane-aligned (8,128) vector store -------
    row = lax.broadcasted_iota(jnp.int32, (8, 128), 0)
    blk = jnp.where(row == 0, reg_sum, 0.0)
    blk = jnp.where(row == 1, ce_sum, blk)
    blk = jnp.where(row == 2, var_sum, blk)
    part_ref[...] = blk.astype(f32)

    bade_ref[...] = best_ade.astype(jnp.int32)
    bfde_ref[...] = best_fde.astype(jnp.int32)


# ----------------------------------------------------------------------------
# Wrapper: lane-dense re-layout (plain JAX, dense DMA) + gridded pallas_call
# ----------------------------------------------------------------------------
def _split_xy_lane_dense(a, n_pad):
    """(..., N, T, 2) -> x,y planes shaped (..., T, N_pad): agents on lanes."""
    ax = jnp.moveaxis(a[..., 0], -2, -1)
    ay = jnp.moveaxis(a[..., 1], -2, -1)
    pad = n_pad - ax.shape[-1]
    cfg = [(0, 0)] * (ax.ndim - 1) + [(0, pad)]
    return jnp.pad(ax, cfg), jnp.pad(ay, cfg)


def _msatra_loss_pallas(out_mu, out_sigma, out_pi, y, pred_length):
    K, N, T, _ = out_mu.shape
    n_pad128 = _round_up(N, LANE)
    tile_n = min(512, n_pad128)            # >=512 lanes keeps HBM roofline high
    n_pad = _round_up(N, tile_n)
    num_tiles = n_pad // tile_n

    # Native dtype is kept; upcast to f32 happens inside the kernel.
    # TODO(synk): have the upstream decoder emit (K, T, N)-plane layout directly
    # so this relayout pass disappears.
    mu_x, mu_y = _split_xy_lane_dense(out_mu, n_pad)
    sg_x, sg_y = _split_xy_lane_dense(out_sigma, n_pad)
    y_x, y_y = _split_xy_lane_dense(y, n_pad)
    pi_t = jnp.pad(out_pi.T, ((0, 0), (0, n_pad - N)))

    kern = functools.partial(_msatra_tile_kernel, n_valid=N,
                             pred_length=float(pred_length))

    ktn = pl.BlockSpec((K, T, tile_n), lambda i: (0, 0, i))
    tn = pl.BlockSpec((T, tile_n), lambda i: (0, i))
    kn = pl.BlockSpec((K, tile_n), lambda i: (0, i))

    bytes_in = sum(int(a.size) * a.dtype.itemsize
                   for a in (mu_x, mu_y, sg_x, sg_y, y_x, y_y, pi_t))
    bytes_out = num_tiles * 8 * 128 * 4 + 2 * n_pad * 4
    n_pairs = K * (K - 1) // 2
    flops = n_pad * (K * T * 8 + n_pairs * T * 8 + T * 16 + K * 16)
    trans = n_pad * ((K + n_pairs) * T + 2 * K + T + 4)

    partials, bade, bfde = pl.pallas_call(
        kern,
        grid=(num_tiles,),
        in_specs=[ktn, ktn, ktn, ktn, tn, tn, kn],
        out_specs=(pl.BlockSpec((8, 128), lambda i: (i, 0)),
                   pl.BlockSpec((1, tile_n), lambda i: (0, i)),
                   pl.BlockSpec((1, tile_n), lambda i: (0, i))),
        out_shape=(jax.ShapeDtypeStruct((num_tiles * 8, 128), jnp.float32),
                   jax.ShapeDtypeStruct((1, n_pad), jnp.int32),
                   jax.ShapeDtypeStruct((1, n_pad), jnp.int32)),
        compiler_params=pltpu.CompilerParams(
            dimension_semantics=("parallel",)),
        cost_estimate=pl.CostEstimate(flops=int(flops),
                                      transcendentals=int(trans),
                                      bytes_accessed=int(bytes_in + bytes_out)),
    )(mu_x, mu_y, sg_x, sg_y, y_x, y_y, pi_t)

    # reduce per-tile partial sums: [reg_sum, ce_sum, var_sum]
    sums = jnp.sum(partials.reshape(num_tiles, 8, 128)[:, :3, 0], axis=0)
    return sums, bade, bfde


# ----------------------------------------------------------------------------
# MSATra loss-side forward (training branch tail)
# ----------------------------------------------------------------------------
def _msatra_loss_forward_impl(out_mu, out_sigma, out_pi, y, pre_obs,
                              align_loss, log_vars, *, pred_length):
    K, N, T, _ = out_mu.shape
    sums, bade, bfde = _msatra_loss_pallas(out_mu, out_sigma, out_pi, y,
                                           pred_length)
    reg_loss = sums[0] / (N * T * 2)          # LaplaceNLLLoss(reduction='mean')
    cls_loss = sums[1] / N                    # SoftTargetCE(reduction='mean')
    variety_loss = -sums[2] / N               # diversity_loss
    predict_loss = reg_loss + cls_loss

    # DynamicWeightedLoss: tiny scalar math kept in plain JAX so the kernel's
    # N-grid stays "parallel" (both v7x TensorCores).
    e = jnp.exp(-log_vars.astype(jnp.float32))
    total_loss = (0.5 * e[0] * predict_loss + 0.5 * e[1] * align_loss
                  + 0.5 * e[2] * variety_loss + jnp.log(e[0] * e[1] * e[2]))

    # full_pre_tra: reuse best-mode indices computed inside the kernel.
    ar = jnp.arange(N)
    sample_ade = out_mu[bade[0, :N], ar].transpose(1, 0, 2)   # (T, N, 2)
    sample_fde = out_mu[bfde[0, :N], ar].transpose(1, 0, 2)
    full_pre_tra = [jnp.concatenate([pre_obs, sample_ade], axis=0),
                    jnp.concatenate([pre_obs, sample_fde], axis=0)]
    return total_loss, predict_loss, variety_loss, full_pre_tra


msatra_loss_forward = jax.jit(_msatra_loss_forward_impl,
                              static_argnames=("pred_length",))


if __name__ == "__main__":
    key = jax.random.PRNGKey(0)
    K, N, T, D = 3, 8, 8, 2            # modes, agents, pred_length, xy
    obs_length = 9                     # pre_obs has obs_length-1 steps

    k1, k2, k3, k4, k5 = jax.random.split(key, 5)
    out_mu = jax.random.normal(k1, (K, N, T, D), dtype=jnp.float32)
    out_sigma = (jax.nn.softplus(jax.random.normal(k2, (K, N, T, D)))
                 + 0.1).astype(jnp.float32)
    out_pi = jax.random.normal(k3, (N, K), dtype=jnp.float32)
    y = jax.random.normal(k4, (N, T, D), dtype=jnp.float32)
    pre_obs = jax.random.normal(k5, (obs_length - 1, N, D), dtype=jnp.float32)

    # DynamicWeightedLoss parameters: nn.Parameter(torch.zeros(1)) each.
    log_vars = jnp.zeros((3,), dtype=jnp.float32)

    # TODO(synk): align_loss normally comes from mmdAndwassersteinDis +
    # Attention_TwoValue (definitions not provided); use a fixed scalar here.
    align_loss = jnp.float32(0.25)

    total_loss, predict_loss, variety_loss, full_pre_tra = msatra_loss_forward(
        out_mu, out_sigma, out_pi, y, pre_obs, align_loss, log_vars,
        pred_length=T)

    jax.block_until_ready((total_loss, predict_loss, variety_loss,
                           full_pre_tra[0], full_pre_tra[1]))
    print("KERNEL_OK")
</pallas_src>

<mosaic_0001>
module attributes {stable_mosaic.version = 11 : i64} {
  func.func @_msatra_tile_kernel(%arg0: i32, %arg1: memref<3x8x128xf32, #tpu.memory_space<vmem>>, %arg2: memref<3x8x128xf32, #tpu.memory_space<vmem>>, %arg3: memref<3x8x128xf32, #tpu.memory_space<vmem>>, %arg4: memref<3x8x128xf32, #tpu.memory_space<vmem>>, %arg5: memref<8x128xf32, #tpu.memory_space<vmem>>, %arg6: memref<8x128xf32, #tpu.memory_space<vmem>>, %arg7: memref<3x128xf32, #tpu.memory_space<vmem>>, %arg8: memref<8x128xf32, #tpu.memory_space<vmem>>, %arg9: memref<1x128xi32, #tpu.memory_space<vmem>>, %arg10: memref<1x128xi32, #tpu.memory_space<vmem>>) attributes {dimension_semantics = [#tpu.dimension_semantics<parallel>], iteration_bounds = array<i64: 1>, scalar_prefetch = 0 : i64, scratch_operands = 0 : i64, tpu.core_type = #tpu.core_type<tc>, window_params = [{transform_indices = @transform_0, window_bounds = array<i64: 3, 8, 128>}, {transform_indices = @transform_1, window_bounds = array<i64: 3, 8, 128>}, {transform_indices = @transform_2, window_bounds = array<i64: 3, 8, 128>}, {transform_indices = @transform_3, window_bounds = array<i64: 3, 8, 128>}, {transform_indices = @transform_4, window_bounds = array<i64: 8, 128>}, {transform_indices = @transform_5, window_bounds = array<i64: 8, 128>}, {transform_indices = @transform_6, window_bounds = array<i64: 3, 128>}, {transform_indices = @transform_7, window_bounds = array<i64: 8, 128>}, {transform_indices = @transform_8, window_bounds = array<i64: 1, 128>}, {transform_indices = @transform_9, window_bounds = array<i64: 1, 128>}]} {
    %c0 = arith.constant 0 : index
    %c0_0 = arith.constant 0 : index
    %c0_1 = arith.constant 0 : index
    %0 = vector.load %arg1[%c0, %c0_0, %c0_1] : memref<3x8x128xf32, #tpu.memory_space<vmem>>, vector<3x8x128xf32>
    %c0_2 = arith.constant 0 : index
    %c0_3 = arith.constant 0 : index
    %c0_4 = arith.constant 0 : index
    %1 = vector.load %arg2[%c0_2, %c0_3, %c0_4] : memref<3x8x128xf32, #tpu.memory_space<vmem>>, vector<3x8x128xf32>
    %c0_5 = arith.constant 0 : index
    %c0_6 = arith.constant 0 : index
    %c0_7 = arith.constant 0 : index
    %2 = vector.load %arg3[%c0_5, %c0_6, %c0_7] : memref<3x8x128xf32, #tpu.memory_space<vmem>>, vector<3x8x128xf32>
    %c0_8 = arith.constant 0 : index
    %c0_9 = arith.constant 0 : index
    %c0_10 = arith.constant 0 : index
    %3 = vector.load %arg4[%c0_8, %c0_9, %c0_10] : memref<3x8x128xf32, #tpu.memory_space<vmem>>, vector<3x8x128xf32>
    %c0_11 = arith.constant 0 : index
    %c0_12 = arith.constant 0 : index
    %4 = vector.load %arg5[%c0_11, %c0_12] : memref<8x128xf32, #tpu.memory_space<vmem>>, vector<8x128xf32>
    %c0_13 = arith.constant 0 : index
    %c0_14 = arith.constant 0 : index
    %5 = vector.load %arg6[%c0_13, %c0_14] : memref<8x128xf32, #tpu.memory_space<vmem>>, vector<8x128xf32>
    %c0_15 = arith.constant 0 : index
    %c0_16 = arith.constant 0 : index
    %6 = vector.load %arg7[%c0_15, %c0_16] : memref<3x128xf32, #tpu.memory_space<vmem>>, vector<3x128xf32>
    %c128_i32 = arith.constant 128 : i32
    %7 = arith.muli %arg0, %c128_i32 : i32
    %8 = tpu.iota {dimensions = array<i32: 1>} : vector<1x128xi32>
    %9 = vector.broadcast %7 : i32 to vector<1x128xi32>
    %10 = arith.addi %9, %8 : vector<1x128xi32>
    %c8_i32 = arith.constant 8 : i32
    %11 = vector.broadcast %c8_i32 : i32 to vector<1x128xi32>
    %12 = arith.cmpi slt, %10, %11 : vector<1x128xi32>
    %13 = vector.shape_cast %4 : vector<8x128xf32> to vector<1x8x128xf32>
    %14 = vector.broadcast %13 : vector<1x8x128xf32> to vector<3x8x128xf32>
    %15 = arith.subf %0, %14 : vector<3x8x128xf32>
    %16 = vector.shape_cast %5 : vector<8x128xf32> to vector<1x8x128xf32>
    %17 = vector.broadcast %16 : vector<1x8x128xf32> to vector<3x8x128xf32>
    %18 = arith.subf %1, %17 : vector<3x8x128xf32>
    %19 = arith.mulf %15, %15 : vector<3x8x128xf32>
    %20 = arith.mulf %18, %18 : vector<3x8x128xf32>
    %21 = arith.addf %19, %20 : vector<3x8x128xf32>
    %22 = math.sqrt %21 : vector<3x8x128xf32>
    %cst = arith.constant dense<0.000000e+00> : vector<3x128xf32>
    %23 = vector.multi_reduction <add>, %22, %cst [1] : vector<3x8x128xf32> to vector<3x128xf32>
    %24 = tpu.iota {dimensions = array<i32: 0>} : vector<3x128xi32>
    %cst_17 = arith.constant dense<0x7F800000> : vector<128xf32>
    %25 = vector.multi_reduction <minimumf>, %23, %cst_17 [0] : vector<3x128xf32> to vector<128xf32>
    %26 = vector.shape_cast %25 : vector<128xf32> to vector<1x128xf32>
    %27 = vector.broadcast %26 : vector<1x128xf32> to vector<3x128xf32>
    %28 = arith.cmpf oeq, %23, %27 : vector<3x128xf32>
    %c3_i32 = arith.constant 3 : i32
    %29 = vector.broadcast %c3_i32 : i32 to vector<3x128xi32>
    %30 = arith.select %28, %24, %29 : vector<3x128xi1>, vector<3x128xi32>
    %cst_18 = arith.constant dense<2147483647> : vector<128xi32>
    %31 = vector.multi_reduction <minsi>, %30, %cst_18 [0] : vector<3x128xi32> to vector<128xi32>
    %32 = vector.shape_cast %31 : vector<128xi32> to vector<1x128xi32>
    %33 = vector.broadcast %32 : vector<1x128xi32> to vector<3x128xi32>
    %34 = arith.cmpi eq, %24, %33 : vector<3x128xi32>
    %35 = arith.extui %34 : vector<3x128xi1> to vector<3x128xi32>
    %36 = arith.sitofp %35 : vector<3x128xi32> to vector<3x128xf32>
    %37 = vector.shape_cast %36 : vector<3x128xf32> to vector<3x1x128xf32>
    %38 = vector.broadcast %37 : vector<3x1x128xf32> to vector<3x8x128xf32>
    %39 = arith.mulf %15, %38 : vector<3x8x128xf32>
    %cst_19 = arith.constant dense<0.000000e+00> : vector<8x128xf32>
    %40 = vector.multi_reduction <add>, %39, %cst_19 [0] : vector<3x8x128xf32> to vector<8x128xf32>
    %41 = math.absf %40 : vector<8x128xf32>
    %42 = vector.broadcast %37 : vector<3x1x128xf32> to vector<3x8x128xf32>
    %43 = arith.mulf %18, %42 : vector<3x8x128xf32>
    %cst_20 = arith.constant dense<0.000000e+00> : vector<8x128xf32>
    %44 = vector.multi_reduction <add>, %43, %cst_20 [0] : vector<3x8x128xf32> to vector<8x128xf32>
    %45 = math.absf %44 : vector<8x128xf32>
    %46 = vector.broadcast %37 : vector<3x1x128xf32> to vector<3x8x128xf32>
    %47 = arith.mulf %2, %46 : vector<3x8x128xf32>
    %cst_21 = arith.constant dense<0.000000e+00> : vector<8x128xf32>
    %48 = vector.multi_reduction <add>, %47, %cst_21 [0] : vector<3x8x128xf32> to vector<8x128xf32>
    %cst_22 = arith.constant 9.99999997E-7 : f32
    %49 = vector.broadcast %cst_22 : f32 to vector<8x128xf32>
    %50 = arith.maximumf %48, %49 : vector<8x128xf32>
    %51 = vector.broadcast %37 : vector<3x1x128xf32> to vector<3x8x128xf32>
    %52 = arith.mulf %3, %51 : vector<3x8x128xf32>
    %cst_23 = arith.constant dense<0.000000e+00> : vector<8x128xf32>
    %53 = vector.multi_reduction <add>, %52, %cst_23 [0] : vector<3x8x128xf32> to vector<8x128xf32>
    %cst_24 = arith.constant 9.99999997E-7 : f32
    %54 = vector.broadcast %cst_24 : f32 to vector<8x128xf32>
    %55 = arith.maximumf %53, %54 : vector<8x128xf32>
    %cst_25 = arith.constant 4.000000e+00 : f32
    %56 = vector.broadcast %cst_25 : f32 to vector<8x128xf32>
    %57 = arith.mulf %56, %50 : vector<8x128xf32>
    %58 = arith.mulf %57, %55 : vector<8x128xf32>
    %59 = math.log %58 : vector<8x128xf32>
    %60 = arith.divf %41, %50 : vector<8x128xf32>
    %61 = arith.addf %59, %60 : vector<8x128xf32>
    %62 = arith.divf %45, %55 : vector<8x128xf32>
    %63 = arith.addf %61, %62 : vector<8x128xf32>
    %cst_26 = arith.constant 0.000000e+00 : f32
    %64 = vector.shape_cast %12 : vector<1x128xi1> to vector<1x128xi1>
    %65 = vector.broadcast %64 : vector<1x128xi1> to vector<8x128xi1>
    %66 = vector.broadcast %cst_26 : f32 to vector<8x128xf32>
    %67 = arith.select %65, %63, %66 : vector<8x128xi1>, vector<8x128xf32>
    %68 = vector.shape_cast %67 : vector<8x128xf32> to vector<1x8x128xf32>
    %cst_27 = arith.constant dense<0.000000e+00> : vector<1xf32>
    %69 = vector.multi_reduction <add>, %68, %cst_27 [1, 2] : vector<1x8x128xf32> to vector<1xf32>
    %70 = vector.shape_cast %69 : vector<1xf32> to vector<1x1x1xf32>
    %71 = vector.extract %70[0, 0, 0] : f32 from vector<1x1x1xf32>
    %cst_28 = arith.constant -1.250000e-01 : f32
    %72 = vector.broadcast %cst_28 : f32 to vector<3x128xf32>
    %73 = arith.mulf %23, %72 : vector<3x128xf32>
    %cst_29 = arith.constant dense<0xFF800000> : vector<128xf32>
    %74 = vector.multi_reduction <maximumf>, %73, %cst_29 [0] : vector<3x128xf32> to vector<128xf32>
    %75 = vector.shape_cast %74 : vector<128xf32> to vector<1x128xf32>
    %76 = vector.broadcast %75 : vector<1x128xf32> to vector<3x128xf32>
    %77 = arith.subf %73, %76 : vector<3x128xf32>
    %78 = math.exp %77 : vector<3x128xf32>
    %cst_30 = arith.constant dense<0.000000e+00> : vector<128xf32>
    %79 = vector.multi_reduction <add>, %78, %cst_30 [0] : vector<3x128xf32> to vector<128xf32>
    %80 = vector.shape_cast %79 : vector<128xf32> to vector<1x128xf32>
    %81 = vector.broadcast %80 : vector<1x128xf32> to vector<3x128xf32>
    %82 = arith.divf %78, %81 : vector<3x128xf32>
    %cst_31 = arith.constant dense<0xFF800000> : vector<128xf32>
    %83 = vector.multi_reduction <maximumf>, %6, %cst_31 [0] : vector<3x128xf32> to vector<128xf32>
    %84 = vector.shape_cast %83 : vector<128xf32> to vector<1x128xf32>
    %85 = vector.broadcast %84 : vector<1x128xf32> to vector<3x128xf32>
    %86 = arith.subf %6, %85 : vector<3x128xf32>
    %87 = math.exp %86 : vector<3x128xf32>
    %cst_32 = arith.constant dense<0.000000e+00> : vector<128xf32>
    %88 = vector.multi_reduction <add>, %87, %cst_32 [0] : vector<3x128xf32> to vector<128xf32>
    %89 = vector.shape_cast %88 : vector<128xf32> to vector<1x128xf32>
    %90 = math.log %89 : vector<1x128xf32>
    %91 = vector.broadcast %90 : vector<1x128xf32> to vector<3x128xf32>
    %92 = arith.subf %86, %91 : vector<3x128xf32>
    %cst_33 = arith.constant 0.000000e+00 : f32
    %93 = vector.broadcast %cst_33 : f32 to vector<3x128xf32>
    %94 = arith.subf %93, %82 : vector<3x128xf32>
    %95 = arith.mulf %94, %92 : vector<3x128xf32>
    %cst_34 = arith.constant dense<0.000000e+00> : vector<128xf32>
    %96 = vector.multi_reduction <add>, %95, %cst_34 [0] : vector<3x128xf32> to vector<128xf32>
    %97 = vector.shape_cast %96 : vector<128xf32> to vector<1x128xf32>
    %cst_35 = arith.constant 0.000000e+00 : f32
    %98 = vector.broadcast %cst_35 : f32 to vector<1x128xf32>
    %99 = arith.select %12, %97, %98 : vector<1x128xi1>, vector<1x128xf32>
    %100 = vector.shape_cast %99 : vector<1x128xf32> to vector<1x1x128xf32>
    %cst_36 = arith.constant dense<0.000000e+00> : vector<1xf32>
    %101 = vector.multi_reduction <add>, %100, %cst_36 [1, 2] : vector<1x1x128xf32> to vector<1xf32>
    %102 = vector.shape_cast %101 : vector<1xf32> to vector<1x1x1xf32>
    %103 = vector.extract %102[0, 0, 0] : f32 from vector<1x1x1xf32>
    %104 = vector.extract_strided_slice %0 {offsets = [0, 0, 0], sizes = [1, 8, 128], strides = [1, 1, 1]} : vector<3x8x128xf32> to vector<1x8x128xf32>
    %105 = vector.shape_cast %104 : vector<1x8x128xf32> to vector<8x128xf32>
    %106 = vector.extract_strided_slice %0 {offsets = [1, 0, 0], sizes = [1, 8, 128], strides = [1, 1, 1]} : vector<3x8x128xf32> to vector<1x8x128xf32>
    %107 = vector.shape_cast %106 : vector<1x8x128xf32> to vector<8x128xf32>
    %108 = arith.subf %105, %107 : vector<8x128xf32>
    %109 = vector.extract_strided_slice %1 {offsets = [0, 0, 0], sizes = [1, 8, 128], strides = [1, 1, 1]} : vector<3x8x128xf32> to vector<1x8x128xf32>
    %110 = vector.shape_cast %109 : vector<1x8x128xf32> to vector<8x128xf32>
    %111 = vector.extract_strided_slice %1 {offsets = [1, 0, 0], sizes = [1, 8, 128], strides = [1, 1, 1]} : vector<3x8x128xf32> to vector<1x8x128xf32>
    %112 = vector.shape_cast %111 : vector<1x8x128xf32> to vector<8x128xf32>
    %113 = arith.subf %110, %112 : vector<8x128xf32>
    %114 = arith.mulf %108, %108 : vector<8x128xf32>
    %115 = arith.mulf %113, %113 : vector<8x128xf32>
    %116 = arith.addf %114, %115 : vector<8x128xf32>
    %117 = math.sqrt %116 : vector<8x128xf32>
    %cst_37 = arith.constant dense<0.000000e+00> : vector<128xf32>
    %118 = vector.multi_reduction <add>, %117, %cst_37 [0] : vector<8x128xf32> to vector<128xf32>
    %119 = vector.shape_cast %118 : vector<128xf32> to vector<1x128xf32>
    %120 = vector.extract_strided_slice %0 {offsets = [0, 0, 0], sizes = [1, 8, 128], strides = [1, 1, 1]} : vector<3x8x128xf32> to vector<1x8x128xf32>
    %121 = vector.shape_cast %120 : vector<1x8x128xf32> to vector<8x128xf32>
    %122 = vector.extract_strided_slice %0 {offsets = [2, 0, 0], sizes = [1, 8, 128], strides = [1, 1, 1]} : vector<3x8x128xf32> to vector<1x8x128xf32>
    %123 = vector.shape_cast %122 : vector<1x8x128xf32> to vector<8x128xf32>
    %124 = arith.subf %121, %123 : vector<8x128xf32>
    %125 = vector.extract_strided_slice %1 {offsets = [0, 0, 0], sizes = [1, 8, 128], strides = [1, 1, 1]} : vector<3x8x128xf32> to vector<1x8x128xf32>
    %126 = vector.shape_cast %125 : vector<1x8x128xf32> to vector<8x128xf32>
    %127 = vector.extract_strided_slice %1 {offsets = [2, 0, 0], sizes = [1, 8, 128], strides = [1, 1, 1]} : vector<3x8x128xf32> to vector<1x8x128xf32>
    %128 = vector.shape_cast %127 : vector<1x8x128xf32> to vector<8x128xf32>
    %129 = arith.subf %126, %128 : vector<8x128xf32>
    %130 = arith.mulf %124, %124 : vector<8x128xf32>
    %131 = arith.mulf %129, %129 : vector<8x128xf32>
    %132 = arith.addf %130, %131 : vector<8x128xf32>
    %133 = math.sqrt %132 : vector<8x128xf32>
    %cst_38 = arith.constant dense<0.000000e+00> : vector<128xf32>
    %134 = vector.multi_reduction <add>, %133, %cst_38 [0] : vector<8x128xf32> to vector<128xf32>
    %135 = vector.shape_cast %134 : vector<128xf32> to vector<1x128xf32>
    %136 = arith.minimumf %119, %135 : vector<1x128xf32>
    %137 = vector.extract_strided_slice %0 {offsets = [1, 0, 0], sizes = [1, 8, 128], strides = [1, 1, 1]} : vector<3x8x128xf32> to vector<1x8x128xf32>
    %138 = vector.shape_cast %137 : vector<1x8x128xf32> to vector<8x128xf32>
    %139 = vector.extract_strided_slice %0 {offsets = [2, 0, 0], sizes = [1, 8, 128], strides = [1, 1, 1]} : vector<3x8x128xf32> to vector<1x8x128xf32>
    %140 = vector.shape_cast %139 : vector<1x8x128xf32> to vector<8x128xf32>
    %141 = arith.subf %138, %140 : vector<8x128xf32>
    %142 = vector.extract_strided_slice %1 {offsets = [1, 0, 0], sizes = [1, 8, 128], strides = [1, 1, 1]} : vector<3x8x128xf32> to vector<1x8x128xf32>
    %143 = vector.shape_cast %142 : vector<1x8x128xf32> to vector<8x128xf32>
    %144 = vector.extract_strided_slice %1 {offsets = [2, 0, 0], sizes = [1, 8, 128], strides = [1, 1, 1]} : vector<3x8x128xf32> to vector<1x8x128xf32>
    %145 = vector.shape_cast %144 : vector<1x8x128xf32> to vector<8x128xf32>
    %146 = arith.subf %143, %145 : vector<8x128xf32>
    %147 = arith.mulf %141, %141 : vector<8x128xf32>
    %148 = arith.mulf %146, %146 : vector<8x128xf32>
    %149 = arith.addf %147, %148 : vector<8x128xf32>
    %150 = math.sqrt %149 : vector<8x128xf32>
    %cst_39 = arith.constant dense<0.000000e+00> : vector<128xf32>
    %151 = vector.multi_reduction <add>, %150, %cst_39 [0] : vector<8x128xf32> to vector<128xf32>
    %152 = vector.shape_cast %151 : vector<128xf32> to vector<1x128xf32>
    %153 = arith.minimumf %136, %152 : vector<1x128xf32>
    %cst_40 = arith.constant 0.000000e+00 : f32
    %154 = vector.broadcast %cst_40 : f32 to vector<1x128xf32>
    %155 = arith.select %12, %153, %154 : vector<1x128xi1>, vector<1x128xf32>
    %156 = vector.shape_cast %155 : vector<1x128xf32> to vector<1x1x128xf32>
    %cst_41 = arith.constant dense<0.000000e+00> : vector<1xf32>
    %157 = vector.multi_reduction <add>, %156, %cst_41 [1, 2] : vector<1x1x128xf32> to vector<1xf32>
    %158 = vector.shape_cast %157 : vector<1xf32> to vector<1x1x1xf32>
    %159 = vector.extract %158[0, 0, 0] : f32 from vector<1x1x1xf32>
    %160 = vector.extract_strided_slice %22 {offsets = [0, 7, 0], sizes = [3, 1, 128], strides = [1, 1, 1]} : vector<3x8x128xf32> to vector<3x1x128xf32>
    %161 = vector.shape_cast %160 : vector<3x1x128xf32> to vector<3x128xf32>
    %cst_42 = arith.constant dense<0x7F800000> : vector<128xf32>
    %162 = vector.multi_reduction <minimumf>, %161, %cst_42 [0] : vector<3x128xf32> to vector<128xf32>
    %163 = vector.shape_cast %162 : vector<128xf32> to vector<1x128xf32>
    %164 = vector.broadcast %163 : vector<1x128xf32> to vector<3x128xf32>
    %165 = arith.cmpf oeq, %161, %164 : vector<3x128xf32>
    %c3_i32_43 = arith.constant 3 : i32
    %166 = vector.broadcast %c3_i32_43 : i32 to vector<3x128xi32>
    %167 = arith.select %165, %24, %166 : vector<3x128xi1>, vector<3x128xi32>
    %cst_44 = arith.constant dense<2147483647> : vector<128xi32>
    %168 = vector.multi_reduction <minsi>, %167, %cst_44 [0] : vector<3x128xi32> to vector<128xi32>
    %169 = vector.shape_cast %168 : vector<128xi32> to vector<1x128xi32>
    %170 = tpu.iota {dimensions = array<i32: 0>} : vector<8x128xi32>
    %c0_i32 = arith.constant 0 : i32
    %171 = vector.broadcast %c0_i32 : i32 to vector<8x128xi32>
    %172 = arith.cmpi eq, %170, %171 : vector<8x128xi32>
    %cst_45 = arith.constant 0.000000e+00 : f32
    %173 = vector.broadcast %71 : f32 to vector<8x128xf32>
    %174 = vector.broadcast %cst_45 : f32 to vector<8x128xf32>
    %175 = arith.select %172, %173, %174 : vector<8x128xi1>, vector<8x128xf32>
    %c1_i32 = arith.constant 1 : i32
    %176 = vector.broadcast %c1_i32 : i32 to vector<8x128xi32>
    %177 = arith.cmpi eq, %170, %176 : vector<8x128xi32>
    %178 = vector.broadcast %103 : f32 to vector<8x128xf32>
    %179 = arith.select %177, %178, %175 : vector<8x128xi1>, vector<8x128xf32>
    %c2_i32 = arith.constant 2 : i32
    %180 = vector.broadcast %c2_i32 : i32 to vector<8x128xi32>
    %181 = arith.cmpi eq, %170, %180 : vector<8x128xi32>
    %182 = vector.broadcast %159 : f32 to vector<8x128xf32>
    %183 = arith.select %181, %182, %179 : vector<8x128xi1>, vector<8x128xf32>
    %c0_46 = arith.constant 0 : index
    %c0_47 = arith.constant 0 : index
    %184 = vector.load %arg8[%c0_46, %c0_47] : memref<8x128xf32, #tpu.memory_space<vmem>>, vector<8x128xf32>
    tpu.vector_store %arg8[%c0_46, %c0_47], %183 {strides = array<i32>} : memref<8x128xf32, #tpu.memory_space<vmem>>, vector<8x128xf32>,
    %c0_48 = arith.constant 0 : index
    %c0_49 = arith.constant 0 : index
    %185 = vector.load %arg9[%c0_48, %c0_49] : memref<1x128xi32, #tpu.memory_space<vmem>>, vector<1x128xi32>
    tpu.vector_store %arg9[%c0_48, %c0_49], %32 {strides = array<i32>} : memref<1x128xi32, #tpu.memory_space<vmem>>, vector<1x128xi32>,
    %c0_50 = arith.constant 0 : index
    %c0_51 = arith.constant 0 : index
    %186 = vector.load %arg10[%c0_50, %c0_51] : memref<1x128xi32, #tpu.memory_space<vmem>>, vector<1x128xi32>
    tpu.vector_store %arg10[%c0_50, %c0_51], %169 {strides = array<i32>} : memref<1x128xi32, #tpu.memory_space<vmem>>, vector<1x128xi32>,
    return
  }
  func.func @transform_0(%arg0: i32) -> (i32, i32, i32) {
    %c0_i32 = arith.constant 0 : i32
    %c0_i32_0 = arith.constant 0 : i32
    %c0_i32_1 = arith.constant 0 : i32
    return %c0_i32, %c0_i32_0, %arg0 : i32, i32, i32
  }
  func.func @transform_1(%arg0: i32) -> (i32, i32, i32) {
    %c0_i32 = arith.constant 0 : i32
    %c0_i32_0 = arith.constant 0 : i32
    %c0_i32_1 = arith.constant 0 : i32
    return %c0_i32, %c0_i32_0, %arg0 : i32, i32, i32
  }
  func.func @transform_2(%arg0: i32) -> (i32, i32, i32) {
    %c0_i32 = arith.constant 0 : i32
    %c0_i32_0 = arith.constant 0 : i32
    %c0_i32_1 = arith.constant 0 : i32
    return %c0_i32, %c0_i32_0, %arg0 : i32, i32, i32
  }
  func.func @transform_3(%arg0: i32) -> (i32, i32, i32) {
    %c0_i32 = arith.constant 0 : i32
    %c0_i32_0 = arith.constant 0 : i32
    %c0_i32_1 = arith.constant 0 : i32
    return %c0_i32, %c0_i32_0, %arg0 : i32, i32, i32
  }
  func.func @transform_4(%arg0: i32) -> (i32, i32) {
    %c0_i32 = arith.constant 0 : i32
    %c0_i32_0 = arith.constant 0 : i32
    return %c0_i32, %arg0 : i32, i32
  }
  func.func @transform_5(%arg0: i32) -> (i32, i32) {
    %c0_i32 = arith.constant 0 : i32
    %c0_i32_0 = arith.constant 0 : i32
    return %c0_i32, %arg0 : i32, i32
  }
  func.func @transform_6(%arg0: i32) -> (i32, i32) {
    %c0_i32 = arith.constant 0 : i32
    %c0_i32_0 = arith.constant 0 : i32
    return %c0_i32, %arg0 : i32, i32
  }
  func.func @transform_7(%arg0: i32) -> (i32, i32) {
    %c0_i32 = arith.constant 0 : i32
    %c0_i32_0 = arith.constant 0 : i32
    return %arg0, %c0_i32 : i32, i32
  }
  func.func @transform_8(%arg0: i32) -> (i32, i32) {
    %c0_i32 = arith.constant 0 : i32
    %c0_i32_0 = arith.constant 0 : i32
    return %c0_i32, %arg0 : i32, i32
  }
  func.func @transform_9(%arg0: i32) -> (i32, i32) {
    %c0_i32 = arith.constant 0 : i32
    %c0_i32_0 = arith.constant 0 : i32
    return %c0_i32, %arg0 : i32, i32
  }
}

</mosaic_0001>

<llo_original>
// kernel: _msatra_loss_forward_impl.1
$region0: #{_msatra_loss_forward_impl.1}
  #allocation0 [shape = 'u32[]', space=smem, size = 0x4, offset = 0x4, fixed_abs, tag = 'smem constant byte address 0x4 - core index']
  #allocation1 [shape = 'u32[144,128]{1,0:T(1,128)}', space=vmem, size = 0x12000, scoped, tag = 'internal scratch']
  %s0 = inlined_call_operand.vmem [shape: f32[3,8,128], index: 0, kind: input, shape index: {}]
  %s1 = inlined_call_operand.vmem [shape: f32[3,8,128], index: 1, kind: input, shape index: {}]
  %s2 = inlined_call_operand.vmem [shape: f32[3,8,128], index: 2, kind: input, shape index: {}]
  %s3 = inlined_call_operand.vmem [shape: f32[3,8,128], index: 3, kind: input, shape index: {}]
  %s4 = inlined_call_operand.vmem [shape: f32[8,128], index: 4, kind: input, shape index: {}]
  %s5 = inlined_call_operand.vmem [shape: f32[8,128], index: 5, kind: input, shape index: {}]
  %s6 = inlined_call_operand.vmem [shape: f32[3,128], index: 6, kind: input, shape index: {}]
  %s7 = inlined_call_operand.vmem [shape: f32[8,128], index: 7, kind: output, shape index: {0}]
  %s8 = inlined_call_operand.vmem [shape: s32[1,128], index: 8, kind: output, shape index: {1}]
  %s9 = inlined_call_operand.vmem [shape: s32[1,128], index: 9, kind: output, shape index: {2}]
  %10 = xla_tuple %s7, %s8, %s9
  %s11 = sld [smem:[#allocation0]]
  $region54: #{_msatra_loss_forward_impl.1} parent=0
    _
  %s13 = ssub.s32 1, %s11
  %s14 = scalar_select 0, %s13, %s11
  // Predicated region
  $region2: #{_msatra_loss_forward_impl.1} parent=0 // pred_check
    _
  $region3: #{_msatra_loss_forward_impl.1} parent=0 // pred_check_branch
    %16 = sbr.rel (0) target = $region5
  $region4: #{_msatra_loss_forward_impl.1} parent=0 // pred_region
    _
  $region5: #{_msatra_loss_forward_impl.1} parent=0 // pred_fallthru
    _
  // Predicated region
  $region6: #{_msatra_loss_forward_impl.1} parent=0 // pred_check
    _
  $region7: #{_msatra_loss_forward_impl.1} parent=0 // pred_check_branch
    %18 = sbr.rel (0) target = $region9
  $region8: #{_msatra_loss_forward_impl.1} parent=0 // pred_region
    _
  $region9: #{_msatra_loss_forward_impl.1} parent=0 // pred_fallthru
    _
  // Predicated region
  $region10: #{_msatra_loss_forward_impl.1} parent=0 // pred_check
    _
  $region11: #{_msatra_loss_forward_impl.1} parent=0 // pred_check_branch
    %20 = sbr.rel (0) target = $region13
  $region12: #{_msatra_loss_forward_impl.1} parent=0 // pred_region
    _
  $region13: #{_msatra_loss_forward_impl.1} parent=0 // pred_fallthru
    _
  // Predicated region
  $region14: #{_msatra_loss_forward_impl.1} parent=0 // pred_check
    _
  $region15: #{_msatra_loss_forward_impl.1} parent=0 // pred_check_branch
    %22 = sbr.rel (0) target = $region17
  $region16: #{_msatra_loss_forward_impl.1} parent=0 // pred_region
    _
  $region17: #{_msatra_loss_forward_impl.1} parent=0 // pred_fallthru
    _
  // Predicated region
  $region18: #{_msatra_loss_forward_impl.1} parent=0 // pred_check
    _
  $region19: #{_msatra_loss_forward_impl.1} parent=0 // pred_check_branch
    %24 = sbr.rel (0) target = $region21
  $region20: #{_msatra_loss_forward_impl.1} parent=0 // pred_region
    _
  $region21: #{_msatra_loss_forward_impl.1} parent=0 // pred_fallthru
    _
  // Predicated region
  $region22: #{_msatra_loss_forward_impl.1} parent=0 // pred_check
    _
  $region23: #{_msatra_loss_forward_impl.1} parent=0 // pred_check_branch
    %26 = sbr.rel (0) target = $region25
  $region24: #{_msatra_loss_forward_impl.1} parent=0 // pred_region
    _
  $region25: #{_msatra_loss_forward_impl.1} parent=0 // pred_fallthru
    _
  // Predicated region
  $region26: #{_msatra_loss_forward_impl.1} parent=0 // pred_check
    _
  $region27: #{_msatra_loss_forward_impl.1} parent=0 // pred_check_branch
    %28 = sbr.rel (0) target = $region29
  $region28: #{_msatra_loss_forward_impl.1} parent=0 // pred_region
    _
  $region29: #{_msatra_loss_forward_impl.1} parent=0 // pred_fallthru
    _
  %v29 = vld [vmem:[%s0] sm:$0xff]
  %v30 = vld [vmem:[%s0 + $0x8] sm:$0xff]
  %v31 = vld [vmem:[%s0 + $0x10] sm:$0xff]
  %v32 = vld [vmem:[%s1] sm:$0xff]
  %v33 = vld [vmem:[%s1 + $0x8] sm:$0xff]
  %v34 = vld [vmem:[%s1 + $0x10] sm:$0xff]
  %v35 = vld [vmem:[%s2] sm:$0xff]
  %v36 = vld [vmem:[%s2 + $0x8] sm:$0xff]
  %v37 = vld [vmem:[%s2 + $0x10] sm:$0xff]
  %v38 = vld [vmem:[%s3] sm:$0xff]
  %v39 = vld [vmem:[%s3 + $0x8] sm:$0xff]
  %v40 = vld [vmem:[%s3 + $0x10] sm:$0xff]
  %v41 = vld [vmem:[%s4] sm:$0xff]
  %v42 = vld [vmem:[%s5] sm:$0xff]
  %v43 = vld [vmem:[%s6] sm:$0x7]
  %s44 = smul.u32 0, 128
  %v45 = vlaneseq
  %v46 = vand.u32 %v45, 127
  %v47 = vstv %s44
  %v48 = vadd.s32 %v47, %v46
  %vm49 = vcmp.lt.s32.totalorder %v48, 8
  %v50 = vsub.f32 %v29, %v41
  %v51 = vsub.f32 %v30, %v41
  %v52 = vsub.f32 %v31, %v41
  %v53 = vsub.f32 %v32, %v42
  %v54 = vsub.f32 %v33, %v42
  %v55 = vsub.f32 %v34, %v42
  %v56 = vmul.f32 %v50, %v50
  %v57 = vmul.f32 %v51, %v51
  %v58 = vmul.f32 %v52, %v52
  %v59 = vmul.f32 %v53, %v53
  %v60 = vmul.f32 %v54, %v54
  %v61 = vmul.f32 %v55, %v55
  %v62 = vadd.f32 %v56, %v59
  %v63 = vadd.f32 %v57, %v60
  %v64 = vadd.f32 %v58, %v61
  %v65 = vrsqrt.pop %v62
  %v66 = vmul.f32 %v62, %v65
  %vm67 = vcmp.eq.f32.partialorder %v62, inf
  %v68 = vsel %vm67, %v62, %v66
  %vm69 = vcmp.eq.f32.partialorder %v62, 0.0
  %v70 = vand.u32 %v62, 2147483648
  %v71 = vsel %vm69, %v70, %v68
  %v72 = vrsqrt.pop %v63
  %v73 = vmul.f32 %v63, %v72
  %vm74 = vcmp.eq.f32.partialorder %v63, inf
  %v75 = vsel %vm74, %v63, %v73
  %vm76 = vcmp.eq.f32.partialorder %v63, 0.0
  %v77 = vand.u32 %v63, 2147483648
  %v78 = vsel %vm76, %v77, %v75
  %v79 = vrsqrt.pop %v64
  %v80 = vmul.f32 %v64, %v79
  %vm81 = vcmp.eq.f32.partialorder %v64, inf
  %v82 = vsel %vm81, %v64, %v80
  %vm83 = vcmp.eq.f32.partialorder %v64, 0.0
  %v84 = vand.u32 %v64, 2147483648
  %v85 = vsel %vm83, %v84, %v82
  %v86 = vrot.slane %v71, 4
  %v87 = vadd.f32 %v71, %v86
  %v88 = vrot.slane %v87, 2
  %v89 = vadd.f32 %v87, %v88
  %v90 = vrot.slane %v89, 1
  %v91 = vadd.f32 %v89, %v90
  %v92 = vrot.slane %v78, 4
  %v93 = vadd.f32 %v78, %v92
  %v94 = vrot.slane %v93, 2
  %v95 = vadd.f32 %v93, %v94
  %v96 = vrot.slane %v95, 1
  %v97 = vadd.f32 %v95, %v96
  %v98 = vrot.slane %v85, 4
  %v99 = vadd.f32 %v85, %v98
  %v100 = vrot.slane %v99, 2
  %v101 = vadd.f32 %v99, %v100
  %v102 = vrot.slane %v101, 1
  %v103 = vadd.f32 %v101, %v102
  %v104 = vlaneseq
  %v105 = vshrl.u32 %v104, 7
  %v106 = vmin.f32 %v91, %v97
  %v107 = vmin.f32 %v106, %v103
  %vm108 = vcmp.eq.f32.partialorder %v91, %v107
  %vm109 = vcmp.eq.f32.partialorder %v97, %v107
  %vm110 = vcmp.eq.f32.partialorder %v103, %v107
  %v111 = vrot.slane %v105, 1
  %v112 = vrot.slane %v105, 2
  %v113 = vsel %vm108, %v105, 3
  %v114 = vsel %vm109, %v111, 3
  %v115 = vsel %vm110, %v112, 3
  %vm116 = vcmask 1040384
  %v117 = vsel %vm116, %v113, 2147483647
  %v118 = vsel %vm116, %v114, 2147483647
  %v119 = vsel %vm116, %v115, 2147483647
  %vm120 = vcmp.lt.s32.totalorder %v117, %v118
  %v121 = vsel %vm120, %v117, %v118
  %vm122 = vcmp.lt.s32.totalorder %v121, %v119
  %v123 = vsel %vm122, %v121, %v119
  %v124 = vlaneseq
  %v125 = vshrl.u32 %v124, 7
  %v126 = vsub.s32 0, %v125
  %v127 = vrot.slane %v123, %v126
  %vm128 = vcmp.eq.s32.totalorder %v105, %v127
  %v129 = vsel %vm128, 1, 0
  %v130 = vcvt.s32.f32 %v129
  %v133 = vunpack.c.l.s4 1966171168
  %v134 = vunpack.c.0.s8 %v133
  %v135 = vlaneseq
  %v136 = vshrl.u32 %v135, 7
  %v137 = vsub.s32 %v134, %v136
  %v138 = vrot.slane %v130, %v137
  %v139 = vcombine.high %v138, %v138
  %v141 = vunpack.c.l.s4 1966171168
  %v142 = vunpack.c.0.s8 %v141
  %v143 = vlaneseq
  %v144 = vshrl.u32 %v143, 7
  %v145 = vsub.s32 %v142, %v144
  %v146 = vrot.slane %v138, %v145
  %v148 = vunpack.c.l.s4 1966171168
  %v149 = vunpack.c.0.s8 %v148
  %v150 = vlaneseq
  %v151 = vshrl.u32 %v150, 7
  %v152 = vsub.s32 %v149, %v151
  %v153 = vrot.slane %v139, %v152
  %v154 = vcombine.high %v146, %v146
  %v155 = vlaneseq
  %v156 = vshrl.u32 %v155, 7
  %v157 = vsub.s32 0, %v156
  %v158 = vrot.slane %v146, %v157
  %v159 = vlaneseq
  %v160 = vshrl.u32 %v159, 7
  %v161 = vsub.s32 0, %v160
  %v162 = vrot.slane %v153, %v161
  %v163 = vlaneseq
  %v164 = vshrl.u32 %v163, 7
  %v165 = vsub.s32 0, %v164
  %v166 = vrot.slane %v154, %v165
  %v170 = vmul.f32 %v50, %v158
  %v171 = vmul.f32 %v51, %v162
  %v172 = vmul.f32 %v52, %v166
  %v173 = vadd.f32 %v170, %v171
  %v174 = vadd.f32 %v173, %v172
  %v175 = vand.u32 2147483647, %v174
  %v176 = vmul.f32 %v53, %v158
  %v177 = vmul.f32 %v54, %v162
  %v178 = vmul.f32 %v55, %v166
  %v179 = vadd.f32 %v176, %v177
  %v180 = vadd.f32 %v179, %v178
  %v181 = vand.u32 2147483647, %v180
  %v182 = vmul.f32 %v35, %v158
  %v183 = vmul.f32 %v36, %v162
  %v184 = vmul.f32 %v37, %v166
  %v185 = vadd.f32 %v182, %v183
  %v186 = vadd.f32 %v185, %v184
  %v187 = vmax.f32 %v186, 1e-06
  %v188 = vmul.f32 %v38, %v158
  %v189 = vmul.f32 %v39, %v162
  %v190 = vmul.f32 %v40, %v166
  %v191 = vadd.f32 %v188, %v189
  %v192 = vadd.f32 %v191, %v190
  %v193 = vmax.f32 %v192, 1e-06
  %v194 = vmul.f32 %v187, 4.0
  %v195 = vmul.f32 %v194, %v193
  %v196 = vlog2.pop %v195
  %v197 = vmul.f32 %v196, 0.6931472
  %v198 = vrcp.pop %v187
  %v199 = vmul.f32 %v175, %v198
  %v200 = vadd.f32 %v197, %v199
  %v201 = vrcp.pop %v193
  %v202 = vmul.f32 %v181, %v201
  %v203 = vadd.f32 %v200, %v202
  %v204 = vsel %vm49, 1, 0
  %vm205 = vcmp.eq.s32.totalorder %v204, 1
  %v206 = vsel %vm205, %v203, 0.0
  %207 = vadd.xlane.f32.xlu0 %v206
  %v208 = vpop.xlane.xlu0 %207
  %v209 = vrot.slane %v208, 4
  %v210 = vadd.f32 %v208, %v209
  %v211 = vrot.slane %v210, 2
  %v212 = vadd.f32 %v210, %v211
  %v213 = vrot.slane %v212, 1
  %v214 = vadd.f32 %v212, %v213
  %s215 = vtos %v214
  %v216 = vmul.f32 %v91, -0.125
  %v217 = vmul.f32 %v97, -0.125
  %v218 = vmul.f32 %v103, -0.125
  %v219 = vmax.f32 %v216, %v217
  %v220 = vmax.f32 %v219, %v218
  %v221 = vsub.f32 %v216, %v220
  %v222 = vsub.f32 %v217, %v220
  %v223 = vsub.f32 %v218, %v220
  %v224 = vmul.f32 %v221, 1.442695
  %v225 = vpow.pop %v224
  %v226 = vmul.f32 %v222, 1.442695
  %v227 = vpow.pop %v226
  %v228 = vmul.f32 %v223, 1.442695
  %v229 = vpow.pop %v228
  %v233 = vrot.slane %v227, 7
  %vm234 = vcmask 1041409
  %v235 = vsel %vm234, %v233, %v225
  %v236 = vrot.slane %v229, 6
  %vm237 = vcmask 1042434
  %v238 = vsel %vm237, %v236, %v235
  %vm240 = vcmask 1042432
  %v241 = vsel %vm240, %v238, 0.0
  %v242 = vrot.slane %v241, 4
  %v243 = vadd.f32 %v241, %v242
  %v244 = vrot.slane %v243, 2
  %v245 = vadd.f32 %v243, %v244
  %v246 = vrot.slane %v245, 1
  %v247 = vadd.f32 %v245, %v246
  %v248 = vlaneseq
  %v249 = vshrl.u32 %v248, 7
  %v250 = vsub.s32 0, %v249
  %v251 = vrot.slane %v247, %v250
  %v252 = vrcp.pop %v251
  %v253 = vmul.f32 %v225, %v252
  %v254 = vmul.f32 %v227, %v252
  %v255 = vmul.f32 %v229, %v252
  %v256 = vsel %vm240, %v43, -inf
  %v257 = vrot.slane %v256, 4
  %v258 = vmax.f32 %v256, %v257
  %v259 = vrot.slane %v258, 2
  %v260 = vmax.f32 %v258, %v259
  %v261 = vrot.slane %v260, 1
  %v262 = vmax.f32 %v260, %v261
  %v263 = vsub.f32 %v43, %v262
  %v264 = vmul.f32 %v263, 1.442695
  %v265 = vpow.pop %v264
  %v266 = vsel %vm240, %v265, 0.0
  %v267 = vrot.slane %v266, 4
  %v268 = vadd.f32 %v266, %v267
  %v269 = vrot.slane %v268, 2
  %v270 = vadd.f32 %v268, %v269
  %v271 = vrot.slane %v270, 1
  %v272 = vadd.f32 %v270, %v271
  %v273 = vlog2.pop %v272
  %v274 = vmul.f32 %v273, 0.6931472
  %v275 = vsub.f32 %v263, %v274
  %v276 = vsub.f32 0.0, %v253
  %v277 = vsub.f32 0.0, %v254
  %v278 = vsub.f32 0.0, %v255
  %v280 = vrot.slane %v275, 1
  %v281 = vrot.slane %v275, 2
  %v285 = vmul.f32 %v276, %v275
  %v286 = vmul.f32 %v277, %v280
  %v287 = vmul.f32 %v278, %v281
  %v291 = vrot.slane %v286, 7
  %v292 = vsel %vm234, %v291, %v285
  %v293 = vrot.slane %v287, 6
  %v294 = vsel %vm237, %v293, %v292
  %v296 = vsel %vm240, %v294, 0.0
  %v297 = vrot.slane %v296, 4
  %v298 = vadd.f32 %v296, %v297
  %v299 = vrot.slane %v298, 2
  %v300 = vadd.f32 %v298, %v299
  %v301 = vrot.slane %v300, 1
  %v302 = vadd.f32 %v300, %v301
  %v303 = vsel %vm49, %v302, 0.0
  %v304 = vsel %vm116, %v303, 0.0
  %305 = vadd.xlane.f32.xlu0 %v304
  %v306 = vpop.xlane.xlu0 %305
  %v307 = vrot.slane %v306, 4
  %v308 = vadd.f32 %v306, %v307
  %v309 = vrot.slane %v308, 2
  %v310 = vadd.f32 %v308, %v309
  %v311 = vrot.slane %v310, 1
  %v312 = vadd.f32 %v310, %v311
  %s313 = vtos %v312
  %v314 = vsub.f32 %v29, %v30
  %v315 = vsub.f32 %v32, %v33
  %v316 = vmul.f32 %v314, %v314
  %v317 = vmul.f32 %v315, %v315
  %v318 = vadd.f32 %v316, %v317
  %v319 = vrsqrt.pop %v318
  %v320 = vmul.f32 %v318, %v319
  %vm321 = vcmp.eq.f32.partialorder %v318, inf
  %v322 = vsel %vm321, %v318, %v320
  %vm323 = vcmp.eq.f32.partialorder %v318, 0.0
  %v324 = vand.u32 %v318, 2147483648
  %v325 = vsel %vm323, %v324, %v322
  %v326 = vrot.slane %v325, 4
  %v327 = vadd.f32 %v325, %v326
  %v328 = vrot.slane %v327, 2
  %v329 = vadd.f32 %v327, %v328
  %v330 = vrot.slane %v329, 1
  %v331 = vadd.f32 %v329, %v330
  %v332 = vsub.f32 %v29, %v31
  %v333 = vsub.f32 %v32, %v34
  %v334 = vmul.f32 %v332, %v332
  %v335 = vmul.f32 %v333, %v333
  %v336 = vadd.f32 %v334, %v335
  %v337 = vrsqrt.pop %v336
  %v338 = vmul.f32 %v336, %v337
  %vm339 = vcmp.eq.f32.partialorder %v336, inf
  %v340 = vsel %vm339, %v336, %v338
  %vm341 = vcmp.eq.f32.partialorder %v336, 0.0
  %v342 = vand.u32 %v336, 2147483648
  %v343 = vsel %vm341, %v342, %v340
  %v344 = vrot.slane %v343, 4
  %v345 = vadd.f32 %v343, %v344
  %v346 = vrot.slane %v345, 2
  %v347 = vadd.f32 %v345, %v346
  %v348 = vrot.slane %v347, 1
  %v349 = vadd.f32 %v347, %v348
  %v350 = vmin.f32 %v331, %v349
  %v351 = vsub.f32 %v30, %v31
  %v352 = vsub.f32 %v33, %v34
  %v353 = vmul.f32 %v351, %v351
  %v354 = vmul.f32 %v352, %v352
  %v355 = vadd.f32 %v353, %v354
  %v356 = vrsqrt.pop %v355
  %v357 = vmul.f32 %v355, %v356
  %vm358 = vcmp.eq.f32.partialorder %v355, inf
  %v359 = vsel %vm358, %v355, %v357
  %vm360 = vcmp.eq.f32.partialorder %v355, 0.0
  %v361 = vand.u32 %v355, 2147483648
  %v362 = vsel %vm360, %v361, %v359
  %v363 = vrot.slane %v362, 4
  %v364 = vadd.f32 %v362, %v363
  %v365 = vrot.slane %v364, 2
  %v366 = vadd.f32 %v364, %v365
  %v367 = vrot.slane %v366, 1
  %v368 = vadd.f32 %v366, %v367
  %v369 = vmin.f32 %v350, %v368
  %v370 = vsel %vm49, %v369, 0.0
  %v371 = vsel %vm116, %v370, 0.0
  %372 = vadd.xlane.f32.xlu0 %v371
  %v373 = vpop.xlane.xlu0 %372
  %v374 = vrot.slane %v373, 4
  %v375 = vadd.f32 %v373, %v374
  %v376 = vrot.slane %v375, 2
  %v377 = vadd.f32 %v375, %v376
  %v378 = vrot.slane %v377, 1
  %v379 = vadd.f32 %v377, %v378
  %s380 = vtos %v379
  %vm381 = vcmask 1047559
  %v382 = vsel %vm381, %v71, inf
  %v383 = vsel %vm381, %v78, inf
  %v384 = vsel %vm381, %v85, inf
  %v385 = vmin.f32 %v382, %v383
  %v386 = vmin.f32 %v385, %v384
  %v387 = vlaneseq
  %v388 = vshrl.u32 %v387, 7
  %v389 = vsub.s32 7, %v388
  %v390 = vrot.slane %v386, %v389
  %vm391 = vcmp.eq.f32.partialorder %v71, %v390
  %vm392 = vcmp.eq.f32.partialorder %v78, %v390
  %vm393 = vcmp.eq.f32.partialorder %v85, %v390
  %v394 = vrot.slane %v105, 3
  %v395 = vsel %vm391, %v111, 3
  %v396 = vsel %vm392, %v112, 3
  %v397 = vsel %vm393, %v394, 3
  %v398 = vsel %vm381, %v395, 2147483647
  %v399 = vsel %vm381, %v396, 2147483647
  %v400 = vsel %vm381, %v397, 2147483647
  %vm401 = vcmp.lt.s32.totalorder %v398, %v399
  %v402 = vsel %vm401, %v398, %v399
  %vm403 = vcmp.lt.s32.totalorder %v402, %v400
  %v404 = vsel %vm403, %v402, %v400
  %vm405 = vcmp.eq.s32.totalorder %v105, 0
  %v406 = vstv %s215
  %v407 = vsel %vm405, %v406, 0.0
  %vm408 = vcmp.eq.s32.totalorder %v105, 1
  %v409 = vstv %s313
  %v410 = vsel %vm408, %v409, %v407
  %vm411 = vcmp.eq.s32.totalorder %v105, 2
  %v412 = vstv %s380
  %v413 = vsel %vm411, %v412, %v410
  %414 = vst [vmem:[%s7] sm:$0xff] %v413
  %415 = vst [vmem:[%s8] sm:$0x1] %v123
  %416 = vst [vmem:[%s9 - $0x7] sm:$0x80] %v404
  // Predicated region
  $region30: #{_msatra_loss_forward_impl.1} parent=0 // pred_check
    _
  $region31: #{_msatra_loss_forward_impl.1} parent=0 // pred_check_branch
    %418 = sbr.rel (0) target = $region33
  $region32: #{_msatra_loss_forward_impl.1} parent=0 // pred_region
    _
  $region33: #{_msatra_loss_forward_impl.1} parent=0 // pred_fallthru
    _
  // Predicated region
  $region34: #{_msatra_loss_forward_impl.1} parent=0 // pred_check
    _
  $region35: #{_msatra_loss_forward_impl.1} parent=0 // pred_check_branch
    %420 = sbr.rel (0) target = $region37
  $region36: #{_msatra_loss_forward_impl.1} parent=0 // pred_region
    _
  $region37: #{_msatra_loss_forward_impl.1} parent=0 // pred_fallthru
    _
  // Predicated region
  $region38: #{_msatra_loss_forward_impl.1} parent=0 // pred_check
    _
  $region39: #{_msatra_loss_forward_impl.1} parent=0 // pred_check_branch
    %422 = sbr.rel (0) target = $region41
  $region40: #{_msatra_loss_forward_impl.1} parent=0 // pred_region
    _
  $region41: #{_msatra_loss_forward_impl.1} parent=0 // pred_fallthru
    _
  // Predicated region
  $region42: #{_msatra_loss_forward_impl.1} parent=0 // pred_check
    _
  $region43: #{_msatra_loss_forward_impl.1} parent=0 // pred_check_branch
    %424 = sbr.rel (0) target = $region45
  $region44: #{_msatra_loss_forward_impl.1} parent=0 // pred_region
    _
  $region45: #{_msatra_loss_forward_impl.1} parent=0 // pred_fallthru
    _
  // Predicated region
  $region46: #{_msatra_loss_forward_impl.1} parent=0 // pred_check
    _
  $region47: #{_msatra_loss_forward_impl.1} parent=0 // pred_check_branch
    %426 = sbr.rel (0) target = $region49
  $region48: #{_msatra_loss_forward_impl.1} parent=0 // pred_region
    _
  $region49: #{_msatra_loss_forward_impl.1} parent=0 // pred_fallthru
    _
  // Predicated region
  $region50: #{_msatra_loss_forward_impl.1} parent=0 // pred_check
    _
  $region51: #{_msatra_loss_forward_impl.1} parent=0 // pred_check_branch
    %428 = sbr.rel (0) target = $region53
  $region52: #{_msatra_loss_forward_impl.1} parent=0 // pred_region
    _
  $region53: #{_msatra_loss_forward_impl.1} parent=0 // pred_fallthru
    _

</llo_original>
